<compile_context>
chip_gen: v7x
topology: tpu7x:2x2x1
jax: 0.10.0
libtpu: 0.0.40
codegen_flags: <defaults>
</compile_context>

<pallas_src>
import jax
import jax.numpy as jnp
from jax.experimental import pallas as pl
from jax.experimental.pallas import tpu as pltpu


def _round_up(x, m):
    return (x + m - 1) // m * m


def _ffn_kernel(x_ref, w1_ref, b1_ref, w2_ref, b2_ref, o_ref, acc_ref):
    # x_ref : (TM, Din)    bf16   row tile of the input
    # w1_ref: (Din, TH)    bf16   hidden-column tile of W1
    # b1_ref: (1, TH)      f32
    # w2_ref: (TH, Dout)   bf16   hidden-row tile of W2
    # b2_ref: (1, Dout)    f32
    # o_ref : (TM, Dout)   out dtype
    # acc_ref:(TM, Dout)   f32 accumulator scratch (persists across the h axis)
    h_idx = pl.program_id(1)

    @pl.when(h_idx == 0)
    def _():
        acc_ref[...] = jnp.zeros_like(acc_ref)

    # dense1 for this hidden tile: bf16 x bf16 -> f32 on the MXU.
    h = jnp.dot(x_ref[...], w1_ref[...], preferred_element_type=jnp.float32)
    h = h + b1_ref[...]                      # bias per hidden column, pre-activation
    h = jnp.where(h > 0, h, 0.2 * h)         # LeakyReLU(0.2)

    # dense2 partial product for this hidden tile, accumulated in f32.
    # NOTE: the activation is dropped to bf16 here to use the bf16 MXU path.
    acc_ref[...] += jnp.dot(h.astype(w2_ref.dtype), w2_ref[...],
                            preferred_element_type=jnp.float32)

    @pl.when(h_idx == pl.num_programs(1) - 1)
    def _():
        o_ref[...] = (acc_ref[...] + b2_ref[...]).astype(o_ref.dtype)


def position_wise_ffn(x, w1, b1, w2, b2, *, tile_m=512, tile_h=512,
                      compute_dtype=jnp.bfloat16):
    """Position-wise FFN: x (..., d_in) -> (..., d_out)."""
    orig_lead = x.shape[:-1]
    d_in = x.shape[-1]
    d_hid = w1.shape[1]
    d_out = w2.shape[1]
    out_dtype = x.dtype

    M = 1
    for s in orig_lead:
        M *= s

    # ---- lane-dense padding: feature dims -> multiples of 128 ----
    d_in_p = _round_up(d_in, 128)
    d_out_p = _round_up(d_out, 128)
    tile_h = _round_up(min(tile_h, _round_up(d_hid, 128)), 128)
    d_hid_p = _round_up(d_hid, tile_h)

    # ---- row tiling: large tiles, pad ragged M ----
    tile_m = _round_up(min(tile_m, _round_up(M, 8)), 8)
    M_p = _round_up(M, tile_m)

    x2 = x.reshape(M, d_in)
    x2 = jnp.pad(x2, ((0, M_p - M), (0, d_in_p - d_in))).astype(compute_dtype)
    w1_p = jnp.pad(w1, ((0, d_in_p - d_in), (0, d_hid_p - d_hid))).astype(compute_dtype)
    w2_p = jnp.pad(w2, ((0, d_hid_p - d_hid), (0, d_out_p - d_out))).astype(compute_dtype)
    b1_p = jnp.pad(b1, (0, d_hid_p - d_hid)).reshape(1, d_hid_p).astype(jnp.float32)
    b2_p = jnp.pad(b2, (0, d_out_p - d_out)).reshape(1, d_out_p).astype(jnp.float32)

    grid = (M_p // tile_m, d_hid_p // tile_h)

    cost = pl.CostEstimate(
        flops=2 * M_p * (d_in_p * d_hid_p + d_hid_p * d_out_p),
        transcendentals=0,
        bytes_accessed=(x2.size * x2.dtype.itemsize
                        + w1_p.size * w1_p.dtype.itemsize
                        + w2_p.size * w2_p.dtype.itemsize
                        + b1_p.size * 4 + b2_p.size * 4
                        + M_p * d_out_p * jnp.dtype(out_dtype).itemsize),
    )

    out_p = pl.pallas_call(
        _ffn_kernel,
        out_shape=jax.ShapeDtypeStruct((M_p, d_out_p), out_dtype),
        grid_spec=pltpu.PrefetchScalarGridSpec(
            num_scalar_prefetch=0,
            grid=grid,
            in_specs=[
                pl.BlockSpec((tile_m, d_in_p), lambda i, h: (i, 0)),    # x rows
                pl.BlockSpec((d_in_p, tile_h), lambda i, h: (0, h)),    # W1 hidden cols
                pl.BlockSpec((1, tile_h), lambda i, h: (0, h)),         # b1 hidden cols
                pl.BlockSpec((tile_h, d_out_p), lambda i, h: (h, 0)),   # W2 hidden rows
                pl.BlockSpec((1, d_out_p), lambda i, h: (0, 0)),        # b2
            ],
            out_specs=pl.BlockSpec((tile_m, d_out_p), lambda i, h: (i, 0)),
            scratch_shapes=[pltpu.VMEM((tile_m, d_out_p), jnp.float32)],
        ),
        compiler_params=pltpu.CompilerParams(
            dimension_semantics=("parallel", "arbitrary"),
            vmem_limit_bytes=64 << 20,
        ),
        cost_estimate=cost,
    )(x2, w1_p, b1_p, w2_p, b2_p)

    return out_p[:M, :d_out].reshape(*orig_lead, d_out)


def _init_linear(key, fan_in, fan_out, dtype=jnp.float32):
    # Mimics nn.Linear's uniform(-1/sqrt(fan_in), +1/sqrt(fan_in)) init.
    kw, kb = jax.random.split(key)
    bound = 1.0 / (fan_in ** 0.5)
    w = jax.random.uniform(kw, (fan_in, fan_out), dtype, minval=-bound, maxval=bound)
    b = jax.random.uniform(kb, (fan_out,), dtype, minval=-bound, maxval=bound)
    return w, b


if __name__ == "__main__":
    key = jax.random.PRNGKey(0)
    k_x, k_l1, k_l2 = jax.random.split(key, 3)

    batch, seq = 2, 8
    num_inputs, num_hiddens, num_outputs = 32, 64, 32

    x = jax.random.normal(k_x, (batch, seq, num_inputs), jnp.float32)
    w1, b1 = _init_linear(k_l1, num_inputs, num_hiddens)
    w2, b2 = _init_linear(k_l2, num_hiddens, num_outputs)

    out = position_wise_ffn(x, w1, b1, w2, b2)
    out = jax.block_until_ready(out)
    assert out.shape == (batch, seq, num_outputs)

    # Reference 1: same mixed-precision pipeline (bf16 operands, f32 accumulate).
    xb = x.reshape(-1, num_inputs).astype(jnp.bfloat16)
    w1b = w1.astype(jnp.bfloat16)
    w2b = w2.astype(jnp.bfloat16)
    h = jnp.dot(xb, w1b, preferred_element_type=jnp.float32) + b1
    h = jnp.where(h > 0, h, 0.2 * h)
    ref_mixed = (jnp.dot(h.astype(jnp.bfloat16), w2b,
                         preferred_element_type=jnp.float32) + b2
                 ).reshape(batch, seq, num_outputs)
    assert jnp.allclose(out, ref_mixed, atol=1e-2, rtol=1e-2), \
        "mismatch vs mixed-precision reference"

    # Reference 2: full-f32 math (semantics of the original nn.Module).
    h32 = x @ w1 + b1
    h32 = jnp.where(h32 > 0, h32, 0.2 * h32)
    ref_f32 = h32 @ w2 + b2
    assert jnp.allclose(out, ref_f32, atol=5e-2, rtol=5e-2), \
        "mismatch vs f32 reference"

    print("KERNEL_OK")
</pallas_src>

<mosaic_0001>
module attributes {stable_mosaic.version = 11 : i64} {
  func.func @_ffn_kernel(%arg0: i32, %arg1: i32, %arg2: memref<16x128xbf16, #tpu.memory_space<vmem>>, %arg3: memref<128x128xbf16, #tpu.memory_space<vmem>>, %arg4: memref<1x128xf32, #tpu.memory_space<vmem>>, %arg5: memref<128x128xbf16, #tpu.memory_space<vmem>>, %arg6: memref<1x128xf32, #tpu.memory_space<vmem>>, %arg7: memref<16x128xf32, #tpu.memory_space<vmem>>, %arg8: memref<16x128xf32, #tpu.memory_space<vmem>>) attributes {dimension_semantics = [#tpu.dimension_semantics<parallel>, #tpu.dimension_semantics<arbitrary>], iteration_bounds = array<i64: 1, 1>, scalar_prefetch = 0 : i64, scratch_operands = 1 : i64, tpu.core_type = #tpu.core_type<tc>, window_params = [{transform_indices = @transform_0, window_bounds = array<i64: 16, 128>}, {transform_indices = @transform_1, window_bounds = array<i64: 128, 128>}, {transform_indices = @transform_2, window_bounds = array<i64: 1, 128>}, {transform_indices = @transform_3, window_bounds = array<i64: 128, 128>}, {pipeline_mode = #tpu.pipeline_mode<synchronous>, transform_indices = @transform_4, window_bounds = array<i64: 1, 128>}, {transform_indices = @transform_5, window_bounds = array<i64: 16, 128>}]} {
    %c0_i32 = arith.constant 0 : i32
    %0 = arith.cmpi eq, %arg1, %c0_i32 : i32
    %1 = arith.extui %0 : i1 to i32
    %c0_i32_0 = arith.constant 0 : i32
    %2 = arith.cmpi ne, %1, %c0_i32_0 : i32
    scf.if %2 {
      %cst_17 = arith.constant 0.000000e+00 : f32
      %23 = vector.broadcast %cst_17 : f32 to vector<16x128xf32>
      %c0_18 = arith.constant 0 : index
      %c0_19 = arith.constant 0 : index
      %24 = vector.load %arg8[%c0_18, %c0_19] : memref<16x128xf32, #tpu.memory_space<vmem>>, vector<16x128xf32>
      tpu.vector_store %arg8[%c0_18, %c0_19], %23 {strides = array<i32>} : memref<16x128xf32, #tpu.memory_space<vmem>>, vector<16x128xf32>,
    } else {
    }
    %c0 = arith.constant 0 : index
    %c0_1 = arith.constant 0 : index
    %3 = vector.load %arg2[%c0, %c0_1] : memref<16x128xbf16, #tpu.memory_space<vmem>>, vector<16x128xbf16>
    %c0_2 = arith.constant 0 : index
    %c0_3 = arith.constant 0 : index
    %4 = vector.load %arg3[%c0_2, %c0_3] : memref<128x128xbf16, #tpu.memory_space<vmem>>, vector<128x128xbf16>
    %cst = arith.constant dense<0.000000e+00> : vector<16x128xf32>
    %5 = tpu.matmul %3, %4, %cst {dimension_numbers = #tpu.dot_dimension_numbers<[1], [0], [0], [1], [0, 0, 1, 1], [], []>} : vector<16x128xbf16>, vector<128x128xbf16>, vector<16x128xf32> -> vector<16x128xf32>
    %c0_4 = arith.constant 0 : index
    %c0_5 = arith.constant 0 : index
    %6 = vector.load %arg4[%c0_4, %c0_5] : memref<1x128xf32, #tpu.memory_space<vmem>>, vector<1x128xf32>
    %7 = vector.broadcast %6 : vector<1x128xf32> to vector<16x128xf32>
    %8 = arith.addf %5, %7 : vector<16x128xf32>
    %cst_6 = arith.constant 0.000000e+00 : f32
    %9 = vector.broadcast %cst_6 : f32 to vector<16x128xf32>
    %10 = arith.cmpf ogt, %8, %9 : vector<16x128xf32>
    %cst_7 = arith.constant 2.000000e-01 : f32
    %11 = vector.broadcast %cst_7 : f32 to vector<16x128xf32>
    %12 = arith.mulf %11, %8 : vector<16x128xf32>
    %13 = arith.select %10, %8, %12 : vector<16x128xi1>, vector<16x128xf32>
    %c0_8 = arith.constant 0 : index
    %c0_9 = arith.constant 0 : index
    %14 = vector.load %arg8[%c0_8, %c0_9] : memref<16x128xf32, #tpu.memory_space<vmem>>, vector<16x128xf32>
    %15 = arith.truncf %13 : vector<16x128xf32> to vector<16x128xbf16>
    %c0_10 = arith.constant 0 : index
    %c0_11 = arith.constant 0 : index
    %16 = vector.load %arg5[%c0_10, %c0_11] : memref<128x128xbf16, #tpu.memory_space<vmem>>, vector<128x128xbf16>
    %cst_12 = arith.constant dense<0.000000e+00> : vector<16x128xf32>
    %17 = tpu.matmul %15, %16, %cst_12 {dimension_numbers = #tpu.dot_dimension_numbers<[1], [0], [0], [1], [0, 0, 1, 1], [], []>} : vector<16x128xbf16>, vector<128x128xbf16>, vector<16x128xf32> -> vector<16x128xf32>
    %18 = arith.addf %14, %17 : vector<16x128xf32>
    %c0_13 = arith.constant 0 : index
    %c0_14 = arith.constant 0 : index
    %19 = vector.load %arg8[%c0_13, %c0_14] : memref<16x128xf32, #tpu.memory_space<vmem>>, vector<16x128xf32>
    tpu.vector_store %arg8[%c0_13, %c0_14], %18 {strides = array<i32>} : memref<16x128xf32, #tpu.memory_space<vmem>>, vector<16x128xf32>,
    %c0_i32_15 = arith.constant 0 : i32
    %20 = arith.cmpi eq, %arg1, %c0_i32_15 : i32
    %21 = arith.extui %20 : i1 to i32
    %c0_i32_16 = arith.constant 0 : i32
    %22 = arith.cmpi ne, %21, %c0_i32_16 : i32
    scf.if %22 {
      %c0_17 = arith.constant 0 : index
      %c0_18 = arith.constant 0 : index
      %23 = vector.load %arg8[%c0_17, %c0_18] : memref<16x128xf32, #tpu.memory_space<vmem>>, vector<16x128xf32>
      %c0_19 = arith.constant 0 : index
      %c0_20 = arith.constant 0 : index
      %24 = vector.load %arg6[%c0_19, %c0_20] : memref<1x128xf32, #tpu.memory_space<vmem>>, vector<1x128xf32>
      %25 = vector.broadcast %24 : vector<1x128xf32> to vector<16x128xf32>
      %26 = arith.addf %23, %25 : vector<16x128xf32>
      %c0_21 = arith.constant 0 : index
      %c0_22 = arith.constant 0 : index
      %27 = vector.load %arg7[%c0_21, %c0_22] : memref<16x128xf32, #tpu.memory_space<vmem>>, vector<16x128xf32>
      tpu.vector_store %arg7[%c0_21, %c0_22], %26 {strides = array<i32>} : memref<16x128xf32, #tpu.memory_space<vmem>>, vector<16x128xf32>,
    } else {
    }
    return
  }
  func.func @transform_0(%arg0: i32, %arg1: i32) -> (i32, i32) {
    %c0_i32 = arith.constant 0 : i32
    %c0_i32_0 = arith.constant 0 : i32
    return %arg0, %c0_i32 : i32, i32
  }
  func.func @transform_1(%arg0: i32, %arg1: i32) -> (i32, i32) {
    %c0_i32 = arith.constant 0 : i32
    %c0_i32_0 = arith.constant 0 : i32
    return %c0_i32, %arg1 : i32, i32
  }
  func.func @transform_2(%arg0: i32, %arg1: i32) -> (i32, i32) {
    %c0_i32 = arith.constant 0 : i32
    %c0_i32_0 = arith.constant 0 : i32
    return %c0_i32, %arg1 : i32, i32
  }
  func.func @transform_3(%arg0: i32, %arg1: i32) -> (i32, i32) {
    %c0_i32 = arith.constant 0 : i32
    %c0_i32_0 = arith.constant 0 : i32
    return %arg1, %c0_i32 : i32, i32
  }
  func.func @transform_4(%arg0: i32, %arg1: i32) -> (i32, i32) {
    %c0_i32 = arith.constant 0 : i32
    %c0_i32_0 = arith.constant 0 : i32
    %c0_i32_1 = arith.constant 0 : i32
    return %c0_i32, %c0_i32_0 : i32, i32
  }
  func.func @transform_5(%arg0: i32, %arg1: i32) -> (i32, i32) {
    %c0_i32 = arith.constant 0 : i32
    %c0_i32_0 = arith.constant 0 : i32
    return %arg0, %c0_i32 : i32, i32
  }
}

</mosaic_0001>

<llo_original>
// kernel: tpu_custom_call.1
$region0: #{tpu_custom_call.1}
  #allocation0 [shape = 'u32[]', space=smem, size = 0x4, offset = 0x4, fixed_abs, tag = 'smem constant byte address 0x4 - core index']
  #allocation1 [shape = 'u32[144,128]{1,0:T(1,128)}', space=vmem, size = 0x12000, scoped, tag = 'internal scratch']
  #allocation2 [shape = 'f32[16,128]{1,0:T(8,128)}', space=vmem, size = 0x2000, scoped, tag = 'scratch operand']
  %s0 = inlined_call_operand.hbm [shape: bf16[16,128], index: 0, kind: input, shape index: {}]
  %s1 = inlined_call_operand.hbm [shape: bf16[128,128], index: 1, kind: input, shape index: {}]
  %s2 = inlined_call_operand.hbm [shape: f32[1,128], index: 2, kind: input, shape index: {}]
  %s3 = inlined_call_operand.hbm [shape: bf16[128,128], index: 3, kind: input, shape index: {}]
  %s4 = inlined_call_operand.hbm [shape: f32[1,128], index: 4, kind: input, shape index: {}]
  %s5 = inlined_call_operand.hbm [shape: f32[16,128], index: 5, kind: output, shape index: {}]
  %s6 = sld [smem:[#allocation0]]
  $region58: #{tpu_custom_call.1} parent=0
    _
  %s8 = ssub.s32 1, %s6
  %s9 = scalar_select 0, %s8, %s6
  $region1: #{tpu_custom_call.1} parent=0
    #allocation3 [shape = 'u8[4096]{0}', space=vmem, size = 0x1000, scoped, tag = 'input window, operand 0, single buffered']
    #allocation4 [shape = 's32[1]{0}', space=sflag, size = 0x4, scoped, tag = 'scoped memory for tpu_custom_call.1']
    #allocation5 [shape = 's32[1]{0}', space=sflag, size = 0x4, scoped, tag = 'scoped memory for tpu_custom_call.1']
    #allocation6 [shape = 'u8[32768]{0}', space=vmem, size = 0x8000, scoped, tag = 'input window, operand 1, single buffered']
    #allocation7 [shape = 's32[1]{0}', space=sflag, size = 0x4, scoped, tag = 'scoped memory for tpu_custom_call.1']
    #allocation8 [shape = 'u8[512]{0}', space=vmem, size = 0x400, scoped, tag = 'input window, operand 2, single buffered']
    #allocation9 [shape = 'u8[32768]{0}', space=vmem, size = 0x8000, scoped, tag = 'input window, operand 3, single buffered']
    #allocation10 [shape = 's32[1]{0}', space=sflag, size = 0x4, scoped, tag = 'scoped memory for tpu_custom_call.1']
    #allocation11 [shape = 'u8[512]{0}', space=vmem, size = 0x400, scoped, tag = 'input window, operand 4, single buffered']
    #allocation12 [shape = 'u8[8192]{0}', space=vmem, size = 0x2000, scoped, tag = 'output window, operand 0, single buffered']
    %10 = vsyncpa [#allocation4], 0
    %11 = vsyncpa [#allocation7], 0
    %12 = vsyncpa [#allocation10], 0
    %13 = vsyncpa [#allocation5], 0
    // Predicated region
    $region2: #{tpu_custom_call.1} parent=1 // pred_check
      _
    $region3: #{tpu_custom_call.1} parent=1 // pred_check_branch
      %15 = sbr.rel (0) target = $region5
    $region4: #{tpu_custom_call.1} parent=1 // pred_region
      %s17 = ssub.s32 128, 128
      %18 = vsyncadd [#allocation4], %s17
      %s19 = sshll.u32 [#allocation3], 4
      %s20 = int_to_ptr.vmem [resolvable:$true] %s19
      %25 = dma.hbm_to_vmem [thread:$0]  %s0, 128, %s20, [#allocation4], 64, 64, 4
    $region5: #{tpu_custom_call.1} parent=1 // pred_fallthru
      _
    // Predicated region
    $region6: #{tpu_custom_call.1} parent=1 // pred_check
      _
    $region7: #{tpu_custom_call.1} parent=1 // pred_check_branch
      %27 = sbr.rel (0) target = $region9
    $region8: #{tpu_custom_call.1} parent=1 // pred_region
      %s29 = ssub.s32 1024, 1024
      %30 = vsyncadd [#allocation7], %s29
      %s31 = sshll.u32 [#allocation6], 4
      %s32 = int_to_ptr.vmem [resolvable:$true] %s31
      %37 = dma.hbm_to_vmem [thread:$0]  %s1, 1024, %s32, [#allocation7], 64, 64, 4
    $region9: #{tpu_custom_call.1} parent=1 // pred_fallthru
      _
    // Predicated region
    $region10: #{tpu_custom_call.1} parent=1 // pred_check
      _
    $region11: #{tpu_custom_call.1} parent=1 // pred_check_branch
      %39 = sbr.rel (0) target = $region13
    $region12: #{tpu_custom_call.1} parent=1 // pred_region
      %s41 = ssub.s32 16, 16
      %42 = vsyncadd [#allocation7], %s41
      %s44 = sshll.u32 [#allocation8], 4
      %s45 = int_to_ptr.vmem [resolvable:$true] %s44
      %47 = dma.hbm_to_vmem [thread:$0]  %s2, 16, %s45, [#allocation7]
    $region13: #{tpu_custom_call.1} parent=1 // pred_fallthru
      _
    // Predicated region
    $region14: #{tpu_custom_call.1} parent=1 // pred_check
      _
    $region15: #{tpu_custom_call.1} parent=1 // pred_check_branch
      %49 = sbr.rel (0) target = $region17
    $region16: #{tpu_custom_call.1} parent=1 // pred_region
      %s51 = ssub.s32 1024, 1024
      %52 = vsyncadd [#allocation10], %s51
      %s53 = sshll.u32 [#allocation9], 4
      %s54 = int_to_ptr.vmem [resolvable:$true] %s53
      %59 = dma.hbm_to_vmem [thread:$0]  %s3, 1024, %s54, [#allocation10], 64, 64, 4
    $region17: #{tpu_custom_call.1} parent=1 // pred_fallthru
      _
    // Predicated region
    $region18: #{tpu_custom_call.1} parent=1 // pred_check
      _
    $region19: #{tpu_custom_call.1} parent=1 // pred_check_branch
      %61 = sbr.rel (0) target = $region21
    $region20: #{tpu_custom_call.1} parent=1 // pred_region
      %s63 = ssub.s32 16, 16
      %64 = vsyncadd [#allocation10], %s63
      %s66 = sshll.u32 [#allocation11], 4
      %s67 = int_to_ptr.vmem [resolvable:$true] %s66
      %69 = dma.hbm_to_vmem [thread:$0]  %s4, 16, %s67, [#allocation10]
    $region21: #{tpu_custom_call.1} parent=1 // pred_fallthru
      _
    // Predicated region
    $region22: #{tpu_custom_call.1} parent=1 // pred_check
      _
    $region23: #{tpu_custom_call.1} parent=1 // pred_check_branch
      %71 = sbr.rel (0) target = $region25
    $region24: #{tpu_custom_call.1} parent=1 // pred_region
      %72 = dma.done [#allocation4], 128
    $region25: #{tpu_custom_call.1} parent=1 // pred_fallthru
      _
    // Predicated region
    $region26: #{tpu_custom_call.1} parent=1 // pred_check
      _
    $region27: #{tpu_custom_call.1} parent=1 // pred_check_branch
      %74 = sbr.rel (0) target = $region29
    $region28: #{tpu_custom_call.1} parent=1 // pred_region
      %75 = dma.done [#allocation7], 1024
    $region29: #{tpu_custom_call.1} parent=1 // pred_fallthru
      _
    // Predicated region
    $region30: #{tpu_custom_call.1} parent=1 // pred_check
      _
    $region31: #{tpu_custom_call.1} parent=1 // pred_check_branch
      %77 = sbr.rel (0) target = $region33
    $region32: #{tpu_custom_call.1} parent=1 // pred_region
      %78 = dma.done [#allocation7], 16
    $region33: #{tpu_custom_call.1} parent=1 // pred_fallthru
      _
    // Predicated region
    $region34: #{tpu_custom_call.1} parent=1 // pred_check
      _
    $region35: #{tpu_custom_call.1} parent=1 // pred_check_branch
      %80 = sbr.rel (0) target = $region37
    $region36: #{tpu_custom_call.1} parent=1 // pred_region
      %81 = dma.done [#allocation10], 1024
    $region37: #{tpu_custom_call.1} parent=1 // pred_fallthru
      _
    // Predicated region
    $region38: #{tpu_custom_call.1} parent=1 // pred_check
      _
    $region39: #{tpu_custom_call.1} parent=1 // pred_check_branch
      %83 = sbr.rel (0) target = $region41
    $region40: #{tpu_custom_call.1} parent=1 // pred_region
      %84 = dma.done [#allocation10], 16
    $region41: #{tpu_custom_call.1} parent=1 // pred_fallthru
      _
    %p86 = scmp.eq.s32.totalorder 0, 0
    // Predicated region
    $region42: #{tpu_custom_call.1} parent=1 // pred_check
      %p87 = pneg %p86
    $region43: #{tpu_custom_call.1} parent=1 // pred_check_branch
      %89 = sbr.rel (%p87) target = $region45
    $region44: #{tpu_custom_call.1} parent=1 // pred_region
      %90 = vst [vmem:[#allocation2] sm:$0xff] 0.0
      %91 = vst [vmem:[#allocation2 + $0x8] sm:$0xff] 0.0
    $region45: #{tpu_custom_call.1} parent=1 // pred_fallthru
      _
    %v92 = vld [vmem:[#allocation3] sm:$0xf]
    %v93 = vld [vmem:[#allocation3 + $0x4] sm:$0xf]
    %v94 = vld [vmem:[#allocation6] sm:$0xf]
    %v95 = vld [vmem:[#allocation6 + $0x4] sm:$0xf]
    %v96 = vld [vmem:[#allocation6 + $0x8] sm:$0xf]
    %v97 = vld [vmem:[#allocation6 + $0xc] sm:$0xf]
    %v98 = vld [vmem:[#allocation6 + $0x10] sm:$0xf]
    %v99 = vld [vmem:[#allocation6 + $0x14] sm:$0xf]
    %v100 = vld [vmem:[#allocation6 + $0x18] sm:$0xf]
    %v101 = vld [vmem:[#allocation6 + $0x1c] sm:$0xf]
    %v102 = vld [vmem:[#allocation6 + $0x20] sm:$0xf]
    %v103 = vld [vmem:[#allocation6 + $0x24] sm:$0xf]
    %v104 = vld [vmem:[#allocation6 + $0x28] sm:$0xf]
    %v105 = vld [vmem:[#allocation6 + $0x2c] sm:$0xf]
    %v106 = vld [vmem:[#allocation6 + $0x30] sm:$0xf]
    %v107 = vld [vmem:[#allocation6 + $0x34] sm:$0xf]
    %v108 = vld [vmem:[#allocation6 + $0x38] sm:$0xf]
    %v109 = vld [vmem:[#allocation6 + $0x3c] sm:$0xf]
    %v110 = vld [vmem:[#allocation8] sm:$0x1]
    %v112 = vlaneseq
    %v113 = vshrl.u32 %v112, 7
    %v114 = vsub.s32 0, %v113
    %v115 = vrot.slane %v110, %v114
    %v119 = vunpack.c.l.b16 %v92
    %v120 = vunpack.c.l.b16 %v93
    %v121 = vpack.c.b16 %v120, %v119
    %v139 = vunpack.c.l.b16 %v94
    %v140 = vunpack.c.l.b16 %v95
    %v141 = vunpack.c.l.b16 %v96
    %v142 = vunpack.c.l.b16 %v97
    %v143 = vunpack.c.l.b16 %v98
    %v144 = vunpack.c.l.b16 %v99
    %v145 = vunpack.c.l.b16 %v100
    %v146 = vunpack.c.l.b16 %v101
    %v147 = vunpack.c.l.b16 %v102
    %v148 = vunpack.c.l.b16 %v103
    %v149 = vunpack.c.l.b16 %v104
    %v150 = vunpack.c.l.b16 %v105
    %v151 = vunpack.c.l.b16 %v106
    %v152 = vunpack.c.l.b16 %v107
    %v153 = vunpack.c.l.b16 %v108
    %v154 = vunpack.c.l.b16 %v109
    %v155 = vpack.c.b16 %v140, %v139
    %v156 = vpack.c.b16 %v142, %v141
    %v157 = vpack.c.b16 %v144, %v143
    %v158 = vpack.c.b16 %v146, %v145
    %v159 = vpack.c.b16 %v148, %v147
    %v160 = vpack.c.b16 %v150, %v149
    %v161 = vpack.c.b16 %v152, %v151
    %v162 = vpack.c.b16 %v154, %v153
    %171 = vmatprep.subr.bf16.mxu0 0
    %172 = vmatpush1.bf16.msra.mxu0 %v155
    %173 = vmatprep.subr.bf16.mxu0 0
    %174 = vmatpush1.bf16.msra.mxu0 %v156
    %175 = vmatprep.subr.bf16.mxu0 0
    %176 = vmatpush1.bf16.msra.mxu0 %v157
    %177 = vmatprep.subr.bf16.mxu0 0
    %178 = vmatpush1.bf16.msra.mxu0 %v158
    %179 = vmatprep.subr.bf16.mxu0 0
    %180 = vmatpush1.bf16.msra.mxu0 %v159
    %181 = vmatprep.subr.bf16.mxu0 0
    %182 = vmatpush1.bf16.msra.mxu0 %v160
    %183 = vmatprep.subr.bf16.mxu0 0
    %184 = vmatpush1.bf16.msra.mxu0 %v161
    %185 = vmatprep.subr.bf16.mxu0 0
    %186 = vmatpush1.bf16.msra.mxu0 %v162
    %187 = vmatprep.subr.bf16.mxu0 0
    %188 = vmatpush1.bf16.msra.mxu0 0
    %189 = vmatprep.subr.bf16.mxu0 0
    %190 = vmatpush1.bf16.msra.mxu0 0
    %191 = vmatprep.subr.bf16.mxu0 0
    %192 = vmatpush1.bf16.msra.mxu0 0
    %193 = vmatprep.subr.bf16.mxu0 0
    %194 = vmatpush1.bf16.msra.mxu0 0
    %195 = vmatprep.subr.bf16.mxu0 0
    %196 = vmatpush1.bf16.msra.mxu0 0
    %197 = vmatprep.subr.bf16.mxu0 0
    %198 = vmatpush1.bf16.msra.mxu0 0
    %199 = vmatprep.subr.bf16.mxu0 0
    %200 = vmatpush1.bf16.msra.mxu0 0
    %201 = vmatprep.subr.bf16.mxu0 0
    %202 = vmatpush1.bf16.msra.mxu0 0
    %203 = vmatprep.mubr.bf16.mxu0 0
    %204 = vmatmul.mubr.bf16.gmra.mrb[0].mxu0 %v121
    %v205 = vpop.f32.mrb[0].mxu0
    %v206 = vadd.f32 %v115, %v205
    %v207 = vpop.f32.mrb[0].mxu0
    %v208 = vpop.f32.mrb[0].mxu0
    %v209 = vadd.f32 %v115, %v208
    %v210 = vpop.f32.mrb[0].mxu0
    %211 = vdwg.mxu0
    %vm212 = vcmp.gt.f32.partialorder %v206, 0.0
    %vm213 = vcmp.gt.f32.partialorder %v209, 0.0
    %v214 = vmul.f32 %v206, 0.2
    %v215 = vmul.f32 %v209, 0.2
    %v216 = vsel %vm212, %v206, %v214
    %v217 = vsel %vm213, %v209, %v215
    %v218 = vld [vmem:[#allocation2] sm:$0xff]
    %v219 = vld [vmem:[#allocation2 + $0x8] sm:$0xff]
    %v220 = vpack.c.bf16 %v217, %v216
    %v221 = vld [vmem:[#allocation9] sm:$0xf]
    %v222 = vld [vmem:[#allocation9 + $0x4] sm:$0xf]
    %v223 = vld [vmem:[#allocation9 + $0x8] sm:$0xf]
    %v224 = vld [vmem:[#allocation9 + $0xc] sm:$0xf]
    %v225 = vld [vmem:[#allocation9 + $0x10] sm:$0xf]
    %v226 = vld [vmem:[#allocation9 + $0x14] sm:$0xf]
    %v227 = vld [vmem:[#allocation9 + $0x18] sm:$0xf]
    %v228 = vld [vmem:[#allocation9 + $0x1c] sm:$0xf]
    %v229 = vld [vmem:[#allocation9 + $0x20] sm:$0xf]
    %v230 = vld [vmem:[#allocation9 + $0x24] sm:$0xf]
    %v231 = vld [vmem:[#allocation9 + $0x28] sm:$0xf]
    %v232 = vld [vmem:[#allocation9 + $0x2c] sm:$0xf]
    %v233 = vld [vmem:[#allocation9 + $0x30] sm:$0xf]
    %v234 = vld [vmem:[#allocation9 + $0x34] sm:$0xf]
    %v235 = vld [vmem:[#allocation9 + $0x38] sm:$0xf]
    %v236 = vld [vmem:[#allocation9 + $0x3c] sm:$0xf]
    %v253 = vunpack.c.l.b16 %v221
    %v254 = vunpack.c.l.b16 %v222
    %v255 = vunpack.c.l.b16 %v223
    %v256 = vunpack.c.l.b16 %v224
    %v257 = vunpack.c.l.b16 %v225
    %v258 = vunpack.c.l.b16 %v226
    %v259 = vunpack.c.l.b16 %v227
    %v260 = vunpack.c.l.b16 %v228
    %v261 = vunpack.c.l.b16 %v229
    %v262 = vunpack.c.l.b16 %v230
    %v263 = vunpack.c.l.b16 %v231
    %v264 = vunpack.c.l.b16 %v232
    %v265 = vunpack.c.l.b16 %v233
    %v266 = vunpack.c.l.b16 %v234
    %v267 = vunpack.c.l.b16 %v235
    %v268 = vunpack.c.l.b16 %v236
    %v269 = vpack.c.b16 %v254, %v253
    %v270 = vpack.c.b16 %v256, %v255
    %v271 = vpack.c.b16 %v258, %v257
    %v272 = vpack.c.b16 %v260, %v259
    %v273 = vpack.c.b16 %v262, %v261
    %v274 = vpack.c.b16 %v264, %v263
    %v275 = vpack.c.b16 %v266, %v265
    %v276 = vpack.c.b16 %v268, %v267
    %285 = vmatprep.subr.bf16.mxu0 0
    %286 = vmatpush1.bf16.msra.mxu0 %v269
    %287 = vmatprep.subr.bf16.mxu0 0
    %288 = vmatpush1.bf16.msra.mxu0 %v270
    %289 = vmatprep.subr.bf16.mxu0 0
    %290 = vmatpush1.bf16.msra.mxu0 %v271
    %291 = vmatprep.subr.bf16.mxu0 0
    %292 = vmatpush1.bf16.msra.mxu0 %v272
    %293 = vmatprep.subr.bf16.mxu0 0
    %294 = vmatpush1.bf16.msra.mxu0 %v273
    %295 = vmatprep.subr.bf16.mxu0 0
    %296 = vmatpush1.bf16.msra.mxu0 %v274
    %297 = vmatprep.subr.bf16.mxu0 0
    %298 = vmatpush1.bf16.msra.mxu0 %v275
    %299 = vmatprep.subr.bf16.mxu0 0
    %300 = vmatpush1.bf16.msra.mxu0 %v276
    %301 = vmatprep.subr.bf16.mxu0 0
    %302 = vmatpush1.bf16.msra.mxu0 0
    %303 = vmatprep.subr.bf16.mxu0 0
    %304 = vmatpush1.bf16.msra.mxu0 0
    %305 = vmatprep.subr.bf16.mxu0 0
    %306 = vmatpush1.bf16.msra.mxu0 0
    %307 = vmatprep.subr.bf16.mxu0 0
    %308 = vmatpush1.bf16.msra.mxu0 0
    %309 = vmatprep.subr.bf16.mxu0 0
    %310 = vmatpush1.bf16.msra.mxu0 0
    %311 = vmatprep.subr.bf16.mxu0 0
    %312 = vmatpush1.bf16.msra.mxu0 0
    %313 = vmatprep.subr.bf16.mxu0 0
    %314 = vmatpush1.bf16.msra.mxu0 0
    %315 = vmatprep.subr.bf16.mxu0 0
    %316 = vmatpush1.bf16.msra.mxu0 0
    %317 = vmatprep.mubr.bf16.mxu0 0
    %318 = vmatmul.mubr.bf16.gmra.mrb[0].mxu0 %v220
    %v319 = vpop.f32.mrb[0].mxu0
    %v320 = vadd.f32 0.0, %v319
    %v321 = vpop.f32.mrb[0].mxu0
    %v322 = vpop.f32.mrb[0].mxu0
    %v323 = vadd.f32 0.0, %v322
    %v324 = vpop.f32.mrb[0].mxu0
    %325 = vdwg.mxu0
    %v326 = vadd.f32 %v218, %v320
    %v327 = vadd.f32 %v219, %v323
    %328 = vst [vmem:[#allocation2] sm:$0xff] %v326
    %329 = vst [vmem:[#allocation2 + $0x8] sm:$0xff] %v327
    // Predicated region
    $region46: #{tpu_custom_call.1} parent=1 // pred_check
      %p330 = pneg %p86
    $region47: #{tpu_custom_call.1} parent=1 // pred_check_branch
      %332 = sbr.rel (%p330) target = $region49
    $region48: #{tpu_custom_call.1} parent=1 // pred_region
      %v333 = vld [vmem:[#allocation2] sm:$0xff]
      %v334 = vld [vmem:[#allocation2 + $0x8] sm:$0xff]
      %v335 = vld [vmem:[#allocation11] sm:$0x1]
      %v337 = vlaneseq
      %v338 = vshrl.u32 %v337, 7
      %v339 = vsub.s32 0, %v338
      %v340 = vrot.slane %v335, %v339
      %v342 = vadd.f32 %v333, %v340
      %v343 = vadd.f32 %v334, %v340
      %344 = vst [vmem:[#allocation12] sm:$0xff] %v342
      %345 = vst [vmem:[#allocation12 + $0x8] sm:$0xff] %v343
    $region49: #{tpu_custom_call.1} parent=1 // pred_fallthru
      _
    // Predicated region
    $region50: #{tpu_custom_call.1} parent=1 // pred_check
      _
    $region51: #{tpu_custom_call.1} parent=1 // pred_check_branch
      %347 = sbr.rel (0) target = $region53
    $region52: #{tpu_custom_call.1} parent=1 // pred_region
      %s349 = ssub.s32 256, 256
      %350 = vsyncadd [#allocation5], %s349
      %s351 = sshll.u32 [#allocation12], 4
      %s352 = int_to_ptr.vmem [resolvable:$true] %s351
      %357 = dma.vmem_to_hbm [thread:$0]  %s352, 256, %s5, [#allocation5], 128, 128, 8
    $region53: #{tpu_custom_call.1} parent=1 // pred_fallthru
      _
    // Predicated region
    $region54: #{tpu_custom_call.1} parent=1 // pred_check
      _
    $region55: #{tpu_custom_call.1} parent=1 // pred_check_branch
      %359 = sbr.rel (0) target = $region57
    $region56: #{tpu_custom_call.1} parent=1 // pred_region
      %360 = dma.done [#allocation5], 256
    $region57: #{tpu_custom_call.1} parent=1 // pred_fallthru
      _
    %361 = vsyncpa [#allocation4], 1
    %362 = vsyncpa [#allocation7], 1
    %363 = vsyncpa [#allocation10], 1
    %364 = vsyncpa [#allocation5], 1

</llo_original>
